<compile_context>
chip_gen: v7x
topology: tpu7x:2x2x1
jax: 0.10.0
libtpu: 0.0.40
codegen_flags: <defaults>
</compile_context>

<pallas_src>
import functools

import jax
import jax.numpy as jnp
from jax.experimental import pallas as pl
from jax.experimental.pallas import tpu as pltpu

_ROW_TILE = 512  # target rows (lanes) streamed per grid step


def _round_up(x: int, m: int) -> int:
    return (x + m - 1) // m * m


# -----------------------------------------------------------------------------
# Kernels
# -----------------------------------------------------------------------------
def _hint_pdf_kernel(conf_t_ref, conf_s_ref, fea_t_ref, fea_s_ref, out_ref,
                     num_acc, den_acc, *, inv_d, loss_weight):
    # conf_*_ref: (6*C, TR)   fea_*_ref: (D, TR)   out_ref: (1, 1) SMEM
    # num_acc / den_acc: (1, TR) f32 VMEM accumulators (lane-dense).
    i = pl.program_id(0)

    @pl.when(i == 0)
    def _init():
        num_acc[...] = jnp.zeros_like(num_acc)
        den_acc[...] = jnp.zeros_like(den_acc)

    ct = conf_t_ref[...].astype(jnp.float32)
    cs = conf_s_ref[...].astype(jnp.float32)
    d = jax.nn.sigmoid(ct) - jax.nn.sigmoid(cs)
    # mean(-1) + avg_pool1d(6,6) == (1/(6C)) * sum over the fused sublane axis;
    # the 1/(6C) cancels in num/den, so accumulate raw sums.
    w = jnp.sum(d * d, axis=0, keepdims=True)            # (1, TR)

    ft = fea_t_ref[...].astype(jnp.float32)
    fs = fea_s_ref[...].astype(jnp.float32)
    e = fs - ft
    m = jnp.sum(e * e, axis=0, keepdims=True)            # (1, TR)

    num_acc[...] += w * m
    den_acc[...] += w

    @pl.when(i == pl.num_programs(0) - 1)
    def _finalize():
        num = jnp.sum(num_acc[...])
        den = jnp.sum(den_acc[...])
        # loss = (sum W*M) / (D * sum W) * loss_weight  (exact divide, no approx)
        out_ref[0, 0] = (num * inv_d / den * loss_weight).astype(jnp.float32)


def _hint_mse_kernel(fea_t_ref, fea_s_ref, out_ref, acc_ref, *, inv_n,
                     loss_weight):
    # fea_*_ref: (TR_rows, D)   acc_ref: (1, D) f32 VMEM   out_ref: (1,1) SMEM
    i = pl.program_id(0)

    @pl.when(i == 0)
    def _init():
        acc_ref[...] = jnp.zeros_like(acc_ref)

    e = fea_s_ref[...].astype(jnp.float32) - fea_t_ref[...].astype(jnp.float32)
    acc_ref[...] += jnp.sum(e * e, axis=0, keepdims=True)

    @pl.when(i == pl.num_programs(0) - 1)
    def _finalize():
        total = jnp.sum(acc_ref[...])
        out_ref[0, 0] = (total * (inv_n * loss_weight)).astype(jnp.float32)


# -----------------------------------------------------------------------------
# Wrappers (layout plumbing + pallas_call)
# -----------------------------------------------------------------------------
def _pdf_loss(conf_t, conf_s, fea_t, fea_s, loss_weight):
    B, A, C = conf_t.shape
    assert A % 6 == 0, "anchor axis must be divisible by avg_pool kernel 6"
    G = A // 6
    C6 = 6 * C
    D = fea_t.shape[-1]
    assert fea_t.shape[:2] == (B, G), (
        "feature shape must be (B, A//6, D) to match avg_pool1d(6, 6)")
    R = B * G

    # Lane-dense layout: long row axis (B*G) on lanes, reduced dims on sublanes.
    # The (R, 6C) reshape is contiguous; the transpose is pure layout plumbing.
    ct = conf_t.reshape(R, C6).T          # (6C, R)
    cs = conf_s.reshape(R, C6).T
    ft = fea_t.reshape(R, D).T            # (D, R)
    fs = fea_s.reshape(R, D).T

    tr = min(_ROW_TILE, _round_up(R, 128))
    r_pad = _round_up(R, tr)
    if r_pad != R:
        pad = ((0, 0), (0, r_pad - R))    # zero rows -> 0 in num and den
        ct = jnp.pad(ct, pad)
        cs = jnp.pad(cs, pad)
        ft = jnp.pad(ft, pad)
        fs = jnp.pad(fs, pad)

    grid = (r_pad // tr,)

    c_item = jnp.dtype(conf_t.dtype).itemsize
    f_item = jnp.dtype(fea_t.dtype).itemsize
    block_bytes = (2 * _round_up(C6, 8) * tr * c_item +
                   2 * _round_up(D, 8) * tr * f_item)
    vmem_limit = int(min(32 * 1024 * 1024,
                         max(4 * 1024 * 1024, 4 * block_bytes)))

    kernel = functools.partial(_hint_pdf_kernel, inv_d=1.0 / float(D),
                               loss_weight=float(loss_weight))
    out = pl.pallas_call(
        kernel,
        out_shape=jax.ShapeDtypeStruct((1, 1), jnp.float32),
        grid=grid,
        in_specs=[
            pl.BlockSpec((C6, tr), lambda i: (0, i)),
            pl.BlockSpec((C6, tr), lambda i: (0, i)),
            pl.BlockSpec((D, tr), lambda i: (0, i)),
            pl.BlockSpec((D, tr), lambda i: (0, i)),
        ],
        out_specs=pl.BlockSpec((1, 1), lambda i: (0, 0),
                               memory_space=pltpu.SMEM),
        scratch_shapes=[pltpu.VMEM((1, tr), jnp.float32),
                        pltpu.VMEM((1, tr), jnp.float32)],
        compiler_params=pltpu.CompilerParams(
            dimension_semantics=("arbitrary",),
            vmem_limit_bytes=vmem_limit),
    )(ct, cs, ft, fs)
    return out[0, 0]


def _mse_loss(fea_t, fea_s, loss_weight):
    assert fea_t.shape == fea_s.shape
    D = fea_t.shape[-1]
    n_true = 1
    for s in fea_t.shape:
        n_true *= int(s)

    ft = fea_t.reshape(-1, D)             # already lane-dense (D last)
    fs = fea_s.reshape(-1, D)
    R = ft.shape[0]

    tr = min(_ROW_TILE, _round_up(R, 8))
    r_pad = _round_up(R, tr)
    if r_pad != R:
        pad = ((0, r_pad - R), (0, 0))    # zero rows add 0 to the sum
        ft = jnp.pad(ft, pad)
        fs = jnp.pad(fs, pad)

    grid = (r_pad // tr,)

    f_item = jnp.dtype(fea_t.dtype).itemsize
    block_bytes = 2 * tr * _round_up(D, 128) * f_item
    vmem_limit = int(min(32 * 1024 * 1024,
                         max(4 * 1024 * 1024, 4 * block_bytes)))

    kernel = functools.partial(_hint_mse_kernel, inv_n=1.0 / float(n_true),
                               loss_weight=float(loss_weight))
    out = pl.pallas_call(
        kernel,
        out_shape=jax.ShapeDtypeStruct((1, 1), jnp.float32),
        grid=grid,
        in_specs=[
            pl.BlockSpec((tr, D), lambda i: (i, 0)),
            pl.BlockSpec((tr, D), lambda i: (i, 0)),
        ],
        out_specs=pl.BlockSpec((1, 1), lambda i: (0, 0),
                               memory_space=pltpu.SMEM),
        scratch_shapes=[pltpu.VMEM((1, D), jnp.float32)],
        compiler_params=pltpu.CompilerParams(
            dimension_semantics=("arbitrary",),
            vmem_limit_bytes=vmem_limit),
    )(ft, fs)
    return out[0, 0]


# -----------------------------------------------------------------------------
# Module wrapper
# -----------------------------------------------------------------------------
class HintLoss:
    """JAX/Pallas port of utils/loss/hint_loss.py::HintLoss (forward only)."""

    def __init__(self, mode: str = "pdf", loss_weight: float = 5.0) -> None:
        self.mode = mode
        self.loss_weight = float(loss_weight)
        print("INFO: Using {} mode...".format(self.mode))

    def __call__(self, pred_t: dict, pred_s: dict) -> jnp.ndarray:
        conf_t = jax.lax.stop_gradient(pred_t["conf"])
        fea_t = jax.lax.stop_gradient(pred_t["feature"])
        conf_s = jax.lax.stop_gradient(pred_s["conf"])
        fea_s = pred_s["feature"]
        # TODO(synk): forward-only; no custom_vjp is defined, so gradients
        # through the pallas_call (mse mode w.r.t. fea_s) are not supported.
        if self.mode == "mse":
            return _mse_loss(fea_t, fea_s, self.loss_weight)
        if self.mode == "pdf":
            return _pdf_loss(conf_t, conf_s, fea_t, fea_s, self.loss_weight)
        raise NotImplementedError(self.mode)


# -----------------------------------------------------------------------------
# Pure-JAX references (sanity checks)
# -----------------------------------------------------------------------------
def _ref_hint_loss_pdf(conf_t, conf_s, fea_t, fea_s, loss_weight):
    disagree = (jax.nn.sigmoid(conf_t) - jax.nn.sigmoid(conf_s)) ** 2
    w = jnp.mean(disagree, axis=-1)                      # (B, A)
    B, A = w.shape
    w = w.reshape(B, A // 6, 6).mean(-1)                 # avg_pool1d(6, 6)
    w = w / jnp.sum(w)
    mse = jnp.mean((fea_s - fea_t) ** 2, axis=-1)        # (B, A//6)
    return jnp.sum(w * mse) * loss_weight


if __name__ == "__main__":
    B, A, C, D = 2, 48, 4, 128          # 48 anchors -> 8 pooled locations
    G = A // 6

    key = jax.random.PRNGKey(0)
    k1, k2, k3, k4 = jax.random.split(key, 4)
    pred_t = {
        "conf": jax.random.normal(k1, (B, A, C), dtype=jnp.float32),
        "feature": jax.random.normal(k2, (B, G, D), dtype=jnp.float32),
    }
    pred_s = {
        "conf": jax.random.normal(k3, (B, A, C), dtype=jnp.float32),
        "feature": jax.random.normal(k4, (B, G, D), dtype=jnp.float32),
    }

    loss_fn = HintLoss(mode="pdf", loss_weight=5.0)
    loss = loss_fn(pred_t, pred_s)
    jax.block_until_ready(loss)
    ref = _ref_hint_loss_pdf(pred_t["conf"], pred_s["conf"],
                             pred_t["feature"], pred_s["feature"], 5.0)
    assert jnp.allclose(loss, ref, rtol=1e-5, atol=1e-5), (loss, ref)

    loss_mse_fn = HintLoss(mode="mse", loss_weight=5.0)
    loss_mse = loss_mse_fn(pred_t, pred_s)
    jax.block_until_ready(loss_mse)
    ref_mse = jnp.mean((pred_s["feature"] - pred_t["feature"]) ** 2) * 5.0
    assert jnp.allclose(loss_mse, ref_mse, rtol=1e-5, atol=1e-5), (loss_mse, ref_mse)

    print("KERNEL_OK")
</pallas_src>

<mosaic_0001>
module attributes {stable_mosaic.version = 11 : i64} {
  func.func @_hint_pdf_kernel(%arg0: i32, %arg1: memref<24x128xf32, #tpu.memory_space<vmem>>, %arg2: memref<24x128xf32, #tpu.memory_space<vmem>>, %arg3: memref<128x128xf32, #tpu.memory_space<vmem>>, %arg4: memref<128x128xf32, #tpu.memory_space<vmem>>, %arg5: memref<1x1xf32, #tpu.memory_space<smem>>, %arg6: memref<1x128xf32, #tpu.memory_space<vmem>>, %arg7: memref<1x128xf32, #tpu.memory_space<vmem>>) attributes {dimension_semantics = [#tpu.dimension_semantics<arbitrary>], iteration_bounds = array<i64: 1>, scalar_prefetch = 0 : i64, scratch_operands = 2 : i64, tpu.core_type = #tpu.core_type<tc>, window_params = [{transform_indices = @transform_0, window_bounds = array<i64: 24, 128>}, {transform_indices = @transform_1, window_bounds = array<i64: 24, 128>}, {transform_indices = @transform_2, window_bounds = array<i64: 128, 128>}, {transform_indices = @transform_3, window_bounds = array<i64: 128, 128>}, {transform_indices = @transform_4, window_bounds = array<i64: 1, 1>}]} {
    %c0_i32 = arith.constant 0 : i32
    %0 = arith.cmpi eq, %arg0, %c0_i32 : i32
    %1 = arith.extui %0 : i1 to i32
    %c0_i32_0 = arith.constant 0 : i32
    %2 = arith.cmpi ne, %1, %c0_i32_0 : i32
    scf.if %2 {
      %cst_21 = arith.constant 0.000000e+00 : f32
      %35 = vector.broadcast %cst_21 : f32 to vector<1x128xf32>
      %c0_22 = arith.constant 0 : index
      %c0_23 = arith.constant 0 : index
      %36 = vector.load %arg6[%c0_22, %c0_23] : memref<1x128xf32, #tpu.memory_space<vmem>>, vector<1x128xf32>
      tpu.vector_store %arg6[%c0_22, %c0_23], %35 {strides = array<i32>} : memref<1x128xf32, #tpu.memory_space<vmem>>, vector<1x128xf32>,
      %cst_24 = arith.constant 0.000000e+00 : f32
      %37 = vector.broadcast %cst_24 : f32 to vector<1x128xf32>
      %c0_25 = arith.constant 0 : index
      %c0_26 = arith.constant 0 : index
      %38 = vector.load %arg7[%c0_25, %c0_26] : memref<1x128xf32, #tpu.memory_space<vmem>>, vector<1x128xf32>
      tpu.vector_store %arg7[%c0_25, %c0_26], %37 {strides = array<i32>} : memref<1x128xf32, #tpu.memory_space<vmem>>, vector<1x128xf32>,
    } else {
    }
    %c0 = arith.constant 0 : index
    %c0_1 = arith.constant 0 : index
    %3 = vector.load %arg1[%c0, %c0_1] : memref<24x128xf32, #tpu.memory_space<vmem>>, vector<24x128xf32>
    %c0_2 = arith.constant 0 : index
    %c0_3 = arith.constant 0 : index
    %4 = vector.load %arg2[%c0_2, %c0_3] : memref<24x128xf32, #tpu.memory_space<vmem>>, vector<24x128xf32>
    %5 = arith.negf %3 : vector<24x128xf32>
    %6 = math.exp %5 : vector<24x128xf32>
    %cst = arith.constant 1.000000e+00 : f32
    %7 = vector.broadcast %cst : f32 to vector<24x128xf32>
    %8 = arith.addf %7, %6 : vector<24x128xf32>
    %9 = arith.divf %7, %8 : vector<24x128xf32>
    %10 = arith.negf %4 : vector<24x128xf32>
    %11 = math.exp %10 : vector<24x128xf32>
    %cst_4 = arith.constant 1.000000e+00 : f32
    %12 = vector.broadcast %cst_4 : f32 to vector<24x128xf32>
    %13 = arith.addf %12, %11 : vector<24x128xf32>
    %14 = arith.divf %12, %13 : vector<24x128xf32>
    %15 = arith.subf %9, %14 : vector<24x128xf32>
    %16 = arith.mulf %15, %15 : vector<24x128xf32>
    %cst_5 = arith.constant dense<0.000000e+00> : vector<128xf32>
    %17 = vector.multi_reduction <add>, %16, %cst_5 [0] : vector<24x128xf32> to vector<128xf32>
    %18 = vector.shape_cast %17 : vector<128xf32> to vector<1x128xf32>
    %c0_6 = arith.constant 0 : index
    %c0_7 = arith.constant 0 : index
    %19 = vector.load %arg3[%c0_6, %c0_7] : memref<128x128xf32, #tpu.memory_space<vmem>>, vector<128x128xf32>
    %c0_8 = arith.constant 0 : index
    %c0_9 = arith.constant 0 : index
    %20 = vector.load %arg4[%c0_8, %c0_9] : memref<128x128xf32, #tpu.memory_space<vmem>>, vector<128x128xf32>
    %21 = arith.subf %20, %19 : vector<128x128xf32>
    %22 = arith.mulf %21, %21 : vector<128x128xf32>
    %cst_10 = arith.constant dense<0.000000e+00> : vector<128xf32>
    %23 = vector.multi_reduction <add>, %22, %cst_10 [0] : vector<128x128xf32> to vector<128xf32>
    %24 = vector.shape_cast %23 : vector<128xf32> to vector<1x128xf32>
    %c0_11 = arith.constant 0 : index
    %c0_12 = arith.constant 0 : index
    %25 = vector.load %arg6[%c0_11, %c0_12] : memref<1x128xf32, #tpu.memory_space<vmem>>, vector<1x128xf32>
    %26 = arith.mulf %18, %24 : vector<1x128xf32>
    %27 = arith.addf %25, %26 : vector<1x128xf32>
    %c0_13 = arith.constant 0 : index
    %c0_14 = arith.constant 0 : index
    %28 = vector.load %arg6[%c0_13, %c0_14] : memref<1x128xf32, #tpu.memory_space<vmem>>, vector<1x128xf32>
    tpu.vector_store %arg6[%c0_13, %c0_14], %27 {strides = array<i32>} : memref<1x128xf32, #tpu.memory_space<vmem>>, vector<1x128xf32>,
    %c0_15 = arith.constant 0 : index
    %c0_16 = arith.constant 0 : index
    %29 = vector.load %arg7[%c0_15, %c0_16] : memref<1x128xf32, #tpu.memory_space<vmem>>, vector<1x128xf32>
    %30 = arith.addf %29, %18 : vector<1x128xf32>
    %c0_17 = arith.constant 0 : index
    %c0_18 = arith.constant 0 : index
    %31 = vector.load %arg7[%c0_17, %c0_18] : memref<1x128xf32, #tpu.memory_space<vmem>>, vector<1x128xf32>
    tpu.vector_store %arg7[%c0_17, %c0_18], %30 {strides = array<i32>} : memref<1x128xf32, #tpu.memory_space<vmem>>, vector<1x128xf32>,
    %c0_i32_19 = arith.constant 0 : i32
    %32 = arith.cmpi eq, %arg0, %c0_i32_19 : i32
    %33 = arith.extui %32 : i1 to i32
    %c0_i32_20 = arith.constant 0 : i32
    %34 = arith.cmpi ne, %33, %c0_i32_20 : i32
    scf.if %34 {
      %c0_21 = arith.constant 0 : index
      %c0_22 = arith.constant 0 : index
      %35 = vector.load %arg6[%c0_21, %c0_22] : memref<1x128xf32, #tpu.memory_space<vmem>>, vector<1x128xf32>
      %36 = vector.shape_cast %35 : vector<1x128xf32> to vector<1x1x128xf32>
      %cst_23 = arith.constant dense<0.000000e+00> : vector<1xf32>
      %37 = vector.multi_reduction <add>, %36, %cst_23 [1, 2] : vector<1x1x128xf32> to vector<1xf32>
      %38 = vector.shape_cast %37 : vector<1xf32> to vector<1x1x1xf32>
      %39 = vector.extract %38[0, 0, 0] : f32 from vector<1x1x1xf32>
      %c0_24 = arith.constant 0 : index
      %c0_25 = arith.constant 0 : index
      %40 = vector.load %arg7[%c0_24, %c0_25] : memref<1x128xf32, #tpu.memory_space<vmem>>, vector<1x128xf32>
      %41 = vector.shape_cast %40 : vector<1x128xf32> to vector<1x1x128xf32>
      %cst_26 = arith.constant dense<0.000000e+00> : vector<1xf32>
      %42 = vector.multi_reduction <add>, %41, %cst_26 [1, 2] : vector<1x1x128xf32> to vector<1xf32>
      %43 = vector.shape_cast %42 : vector<1xf32> to vector<1x1x1xf32>
      %44 = vector.extract %43[0, 0, 0] : f32 from vector<1x1x1xf32>
      %cst_27 = arith.constant 7.812500e-03 : f32
      %45 = arith.mulf %39, %cst_27 : f32
      %46 = arith.divf %45, %44 : f32
      %cst_28 = arith.constant 5.000000e+00 : f32
      %47 = arith.mulf %46, %cst_28 : f32
      %c0_29 = arith.constant 0 : index
      %c0_30 = arith.constant 0 : index
      %48 = memref.load %arg5[%c0_29, %c0_30] : memref<1x1xf32, #tpu.memory_space<smem>>
      memref.store %47, %arg5[%c0_29, %c0_30] : memref<1x1xf32, #tpu.memory_space<smem>>
    } else {
    }
    return
  }
  func.func @transform_0(%arg0: i32) -> (i32, i32) {
    %c0_i32 = arith.constant 0 : i32
    %c0_i32_0 = arith.constant 0 : i32
    return %c0_i32, %arg0 : i32, i32
  }
  func.func @transform_1(%arg0: i32) -> (i32, i32) {
    %c0_i32 = arith.constant 0 : i32
    %c0_i32_0 = arith.constant 0 : i32
    return %c0_i32, %arg0 : i32, i32
  }
  func.func @transform_2(%arg0: i32) -> (i32, i32) {
    %c0_i32 = arith.constant 0 : i32
    %c0_i32_0 = arith.constant 0 : i32
    return %c0_i32, %arg0 : i32, i32
  }
  func.func @transform_3(%arg0: i32) -> (i32, i32) {
    %c0_i32 = arith.constant 0 : i32
    %c0_i32_0 = arith.constant 0 : i32
    return %c0_i32, %arg0 : i32, i32
  }
  func.func @transform_4(%arg0: i32) -> (i32, i32) {
    %c0_i32 = arith.constant 0 : i32
    %c0_i32_0 = arith.constant 0 : i32
    %c0_i32_1 = arith.constant 0 : i32
    return %c0_i32, %c0_i32_0 : i32, i32
  }
}

</mosaic_0001>

<llo_original>
// kernel: tpu_custom_call.1
$region0: #{tpu_custom_call.1}
  #allocation0 [shape = 'u32[]', space=smem, size = 0x4, offset = 0x4, fixed_abs, tag = 'smem constant byte address 0x4 - core index']
  #allocation1 [shape = 'u32[144,128]{1,0:T(1,128)}', space=vmem, size = 0x12000, scoped, tag = 'internal scratch']
  #allocation2 [shape = 'f32[1,128]{1,0:T(1,128)}', space=vmem, size = 0x200, scoped, tag = 'scratch operand']
  #allocation3 [shape = 'f32[1,128]{1,0:T(1,128)}', space=vmem, size = 0x200, scoped, tag = 'scratch operand']
  %s0 = inlined_call_operand.hbm [shape: f32[24,128], index: 0, kind: input, shape index: {}]
  %s1 = inlined_call_operand.hbm [shape: f32[24,128], index: 1, kind: input, shape index: {}]
  %s2 = inlined_call_operand.hbm [shape: f32[128,128], index: 2, kind: input, shape index: {}]
  %s3 = inlined_call_operand.hbm [shape: f32[128,128], index: 3, kind: input, shape index: {}]
  %s4 = inlined_call_operand.hbm [shape: f32[1,1], index: 4, kind: output, shape index: {}]
  %s5 = sld [smem:[#allocation0]]
  $region50: #{tpu_custom_call.1} parent=0
    _
  %s7 = ssub.s32 1, %s5
  %s8 = scalar_select 0, %s7, %s5
  $region1: #{tpu_custom_call.1} parent=0
    #allocation4 [shape = 'u8[12288]{0}', space=vmem, size = 0x3000, scoped, tag = 'input window, operand 0, single buffered']
    #allocation5 [shape = 's32[1]{0}', space=sflag, size = 0x4, scoped, tag = 'scoped memory for tpu_custom_call.1']
    #allocation6 [shape = 's32[1]{0}', space=sflag, size = 0x4, scoped, tag = 'scoped memory for tpu_custom_call.1']
    #allocation7 [shape = 'u8[12288]{0}', space=vmem, size = 0x3000, scoped, tag = 'input window, operand 1, single buffered']
    #allocation8 [shape = 's32[1]{0}', space=sflag, size = 0x4, scoped, tag = 'scoped memory for tpu_custom_call.1']
    #allocation9 [shape = 'u8[65536]{0}', space=vmem, size = 0x10000, scoped, tag = 'input window, operand 2, single buffered']
    #allocation10 [shape = 'u8[65536]{0}', space=vmem, size = 0x10000, scoped, tag = 'input window, operand 3, single buffered']
    #allocation11 [shape = 's32[1]{0}', space=sflag, size = 0x4, scoped, tag = 'scoped memory for tpu_custom_call.1']
    #allocation12 [shape = 'u8[512]{0}', space=smem, size = 0x200, scoped, tag = 'output window, operand 0, single buffered']
    %9 = vsyncpa [#allocation5], 0
    %10 = vsyncpa [#allocation8], 0
    %11 = vsyncpa [#allocation11], 0
    %12 = vsyncpa [#allocation6], 0
    // Predicated region
    $region2: #{tpu_custom_call.1} parent=1 // pred_check
      _
    $region3: #{tpu_custom_call.1} parent=1 // pred_check_branch
      %14 = sbr.rel (0) target = $region5
    $region4: #{tpu_custom_call.1} parent=1 // pred_region
      %s16 = ssub.s32 384, 384
      %17 = vsyncadd [#allocation5], %s16
      %s18 = sshll.u32 [#allocation4], 4
      %s19 = int_to_ptr.vmem [resolvable:$true] %s18
      %24 = dma.hbm_to_vmem [thread:$0]  %s0, 384, %s19, [#allocation5], 128, 128, 8
    $region5: #{tpu_custom_call.1} parent=1 // pred_fallthru
      _
    // Predicated region
    $region6: #{tpu_custom_call.1} parent=1 // pred_check
      _
    $region7: #{tpu_custom_call.1} parent=1 // pred_check_branch
      %26 = sbr.rel (0) target = $region9
    $region8: #{tpu_custom_call.1} parent=1 // pred_region
      %s28 = ssub.s32 384, 384
      %29 = vsyncadd [#allocation8], %s28
      %s30 = sshll.u32 [#allocation7], 4
      %s31 = int_to_ptr.vmem [resolvable:$true] %s30
      %36 = dma.hbm_to_vmem [thread:$0]  %s1, 384, %s31, [#allocation8], 128, 128, 8
    $region9: #{tpu_custom_call.1} parent=1 // pred_fallthru
      _
    // Predicated region
    $region10: #{tpu_custom_call.1} parent=1 // pred_check
      _
    $region11: #{tpu_custom_call.1} parent=1 // pred_check_branch
      %38 = sbr.rel (0) target = $region13
    $region12: #{tpu_custom_call.1} parent=1 // pred_region
      %s40 = ssub.s32 2048, 2048
      %41 = vsyncadd [#allocation8], %s40
      %s42 = sshll.u32 [#allocation9], 4
      %s43 = int_to_ptr.vmem [resolvable:$true] %s42
      %48 = dma.hbm_to_vmem [thread:$0]  %s2, 2048, %s43, [#allocation8], 128, 128, 8
    $region13: #{tpu_custom_call.1} parent=1 // pred_fallthru
      _
    // Predicated region
    $region14: #{tpu_custom_call.1} parent=1 // pred_check
      _
    $region15: #{tpu_custom_call.1} parent=1 // pred_check_branch
      %50 = sbr.rel (0) target = $region17
    $region16: #{tpu_custom_call.1} parent=1 // pred_region
      %s52 = ssub.s32 2048, 2048
      %53 = vsyncadd [#allocation11], %s52
      %s54 = sshll.u32 [#allocation10], 4
      %s55 = int_to_ptr.vmem [resolvable:$true] %s54
      %60 = dma.hbm_to_vmem [thread:$0]  %s3, 2048, %s55, [#allocation11], 128, 128, 8
    $region17: #{tpu_custom_call.1} parent=1 // pred_fallthru
      _
    // Predicated region
    $region18: #{tpu_custom_call.1} parent=1 // pred_check
      _
    $region19: #{tpu_custom_call.1} parent=1 // pred_check_branch
      %62 = sbr.rel (0) target = $region21
    $region20: #{tpu_custom_call.1} parent=1 // pred_region
      %63 = dma.done [#allocation5], 384
    $region21: #{tpu_custom_call.1} parent=1 // pred_fallthru
      _
    // Predicated region
    $region22: #{tpu_custom_call.1} parent=1 // pred_check
      _
    $region23: #{tpu_custom_call.1} parent=1 // pred_check_branch
      %65 = sbr.rel (0) target = $region25
    $region24: #{tpu_custom_call.1} parent=1 // pred_region
      %66 = dma.done [#allocation8], 384
    $region25: #{tpu_custom_call.1} parent=1 // pred_fallthru
      _
    // Predicated region
    $region26: #{tpu_custom_call.1} parent=1 // pred_check
      _
    $region27: #{tpu_custom_call.1} parent=1 // pred_check_branch
      %68 = sbr.rel (0) target = $region29
    $region28: #{tpu_custom_call.1} parent=1 // pred_region
      %69 = dma.done [#allocation8], 2048
    $region29: #{tpu_custom_call.1} parent=1 // pred_fallthru
      _
    // Predicated region
    $region30: #{tpu_custom_call.1} parent=1 // pred_check
      _
    $region31: #{tpu_custom_call.1} parent=1 // pred_check_branch
      %71 = sbr.rel (0) target = $region33
    $region32: #{tpu_custom_call.1} parent=1 // pred_region
      %72 = dma.done [#allocation11], 2048
    $region33: #{tpu_custom_call.1} parent=1 // pred_fallthru
      _
    %p73 = scmp.eq.s32.totalorder 0, 0
    // Predicated region
    $region34: #{tpu_custom_call.1} parent=1 // pred_check
      %p74 = pneg %p73
    $region35: #{tpu_custom_call.1} parent=1 // pred_check_branch
      %76 = sbr.rel (%p74) target = $region37
    $region36: #{tpu_custom_call.1} parent=1 // pred_region
      %77 = vst [vmem:[#allocation2] sm:$0x1] 0.0
      %78 = vst [vmem:[#allocation3] sm:$0x1] 0.0
    $region37: #{tpu_custom_call.1} parent=1 // pred_fallthru
      _
    %v79 = vld [vmem:[#allocation4] sm:$0xff]
    %v80 = vld [vmem:[#allocation4 + $0x8] sm:$0xff]
    %v81 = vld [vmem:[#allocation4 + $0x10] sm:$0xff]
    %v82 = vld [vmem:[#allocation7] sm:$0xff]
    %v83 = vld [vmem:[#allocation7 + $0x8] sm:$0xff]
    %v84 = vld [vmem:[#allocation7 + $0x10] sm:$0xff]
    %v85 = vxor.u32 %v79, 2147483648
    %v86 = vxor.u32 %v80, 2147483648
    %v87 = vxor.u32 %v81, 2147483648
    %v88 = vmul.f32 %v85, 1.442695
    %v89 = vpow.pop %v88
    %v90 = vmul.f32 %v86, 1.442695
    %v91 = vpow.pop %v90
    %v92 = vmul.f32 %v87, 1.442695
    %v93 = vpow.pop %v92
    %v94 = vadd.f32 %v89, 1.0
    %v95 = vadd.f32 %v91, 1.0
    %v96 = vadd.f32 %v93, 1.0
    %v97 = vrcp.pop %v94
    %v98 = vmul.f32 1.0, %v97
    %v99 = vrcp.pop %v95
    %v100 = vmul.f32 1.0, %v99
    %v101 = vrcp.pop %v96
    %v102 = vmul.f32 1.0, %v101
    %v103 = vxor.u32 %v82, 2147483648
    %v104 = vxor.u32 %v83, 2147483648
    %v105 = vxor.u32 %v84, 2147483648
    %v106 = vmul.f32 %v103, 1.442695
    %v107 = vpow.pop %v106
    %v108 = vmul.f32 %v104, 1.442695
    %v109 = vpow.pop %v108
    %v110 = vmul.f32 %v105, 1.442695
    %v111 = vpow.pop %v110
    %v112 = vadd.f32 %v107, 1.0
    %v113 = vadd.f32 %v109, 1.0
    %v114 = vadd.f32 %v111, 1.0
    %v115 = vrcp.pop %v112
    %v116 = vmul.f32 1.0, %v115
    %v117 = vrcp.pop %v113
    %v118 = vmul.f32 1.0, %v117
    %v119 = vrcp.pop %v114
    %v120 = vmul.f32 1.0, %v119
    %v121 = vsub.f32 %v98, %v116
    %v122 = vsub.f32 %v100, %v118
    %v123 = vsub.f32 %v102, %v120
    %v124 = vmul.f32 %v121, %v121
    %v125 = vmul.f32 %v122, %v122
    %v126 = vmul.f32 %v123, %v123
    %v127 = vadd.f32 %v124, %v125
    %v128 = vadd.f32 %v127, %v126
    %v129 = vrot.slane %v128, 4
    %v130 = vadd.f32 %v128, %v129
    %v131 = vrot.slane %v130, 2
    %v132 = vadd.f32 %v130, %v131
    %v133 = vrot.slane %v132, 1
    %v134 = vadd.f32 %v132, %v133
    %v135 = vld [vmem:[#allocation9] sm:$0xff]
    %v136 = vld [vmem:[#allocation9 + $0x8] sm:$0xff]
    %v137 = vld [vmem:[#allocation9 + $0x10] sm:$0xff]
    %v138 = vld [vmem:[#allocation9 + $0x18] sm:$0xff]
    %v139 = vld [vmem:[#allocation9 + $0x20] sm:$0xff]
    %v140 = vld [vmem:[#allocation9 + $0x28] sm:$0xff]
    %v141 = vld [vmem:[#allocation9 + $0x30] sm:$0xff]
    %v142 = vld [vmem:[#allocation9 + $0x38] sm:$0xff]
    %v143 = vld [vmem:[#allocation9 + $0x40] sm:$0xff]
    %v144 = vld [vmem:[#allocation9 + $0x48] sm:$0xff]
    %v145 = vld [vmem:[#allocation9 + $0x50] sm:$0xff]
    %v146 = vld [vmem:[#allocation9 + $0x58] sm:$0xff]
    %v147 = vld [vmem:[#allocation9 + $0x60] sm:$0xff]
    %v148 = vld [vmem:[#allocation9 + $0x68] sm:$0xff]
    %v149 = vld [vmem:[#allocation9 + $0x70] sm:$0xff]
    %v150 = vld [vmem:[#allocation9 + $0x78] sm:$0xff]
    %v151 = vld [vmem:[#allocation10] sm:$0xff]
    %v152 = vld [vmem:[#allocation10 + $0x8] sm:$0xff]
    %v153 = vld [vmem:[#allocation10 + $0x10] sm:$0xff]
    %v154 = vld [vmem:[#allocation10 + $0x18] sm:$0xff]
    %v155 = vld [vmem:[#allocation10 + $0x20] sm:$0xff]
    %v156 = vld [vmem:[#allocation10 + $0x28] sm:$0xff]
    %v157 = vld [vmem:[#allocation10 + $0x30] sm:$0xff]
    %v158 = vld [vmem:[#allocation10 + $0x38] sm:$0xff]
    %v159 = vld [vmem:[#allocation10 + $0x40] sm:$0xff]
    %v160 = vld [vmem:[#allocation10 + $0x48] sm:$0xff]
    %v161 = vld [vmem:[#allocation10 + $0x50] sm:$0xff]
    %v162 = vld [vmem:[#allocation10 + $0x58] sm:$0xff]
    %v163 = vld [vmem:[#allocation10 + $0x60] sm:$0xff]
    %v164 = vld [vmem:[#allocation10 + $0x68] sm:$0xff]
    %v165 = vld [vmem:[#allocation10 + $0x70] sm:$0xff]
    %v166 = vld [vmem:[#allocation10 + $0x78] sm:$0xff]
    %v167 = vsub.f32 %v151, %v135
    %v168 = vsub.f32 %v152, %v136
    %v169 = vsub.f32 %v153, %v137
    %v170 = vsub.f32 %v154, %v138
    %v171 = vsub.f32 %v155, %v139
    %v172 = vsub.f32 %v156, %v140
    %v173 = vsub.f32 %v157, %v141
    %v174 = vsub.f32 %v158, %v142
    %v175 = vsub.f32 %v159, %v143
    %v176 = vsub.f32 %v160, %v144
    %v177 = vsub.f32 %v161, %v145
    %v178 = vsub.f32 %v162, %v146
    %v179 = vsub.f32 %v163, %v147
    %v180 = vsub.f32 %v164, %v148
    %v181 = vsub.f32 %v165, %v149
    %v182 = vsub.f32 %v166, %v150
    %v183 = vmul.f32 %v167, %v167
    %v184 = vmul.f32 %v168, %v168
    %v185 = vmul.f32 %v169, %v169
    %v186 = vmul.f32 %v170, %v170
    %v187 = vmul.f32 %v171, %v171
    %v188 = vmul.f32 %v172, %v172
    %v189 = vmul.f32 %v173, %v173
    %v190 = vmul.f32 %v174, %v174
    %v191 = vmul.f32 %v175, %v175
    %v192 = vmul.f32 %v176, %v176
    %v193 = vmul.f32 %v177, %v177
    %v194 = vmul.f32 %v178, %v178
    %v195 = vmul.f32 %v179, %v179
    %v196 = vmul.f32 %v180, %v180
    %v197 = vmul.f32 %v181, %v181
    %v198 = vmul.f32 %v182, %v182
    %v199 = vadd.f32 %v183, %v184
    %v200 = vadd.f32 %v199, %v185
    %v201 = vadd.f32 %v200, %v186
    %v202 = vadd.f32 %v201, %v187
    %v203 = vadd.f32 %v202, %v188
    %v204 = vadd.f32 %v203, %v189
    %v205 = vadd.f32 %v204, %v190
    %v206 = vadd.f32 %v205, %v191
    %v207 = vadd.f32 %v206, %v192
    %v208 = vadd.f32 %v207, %v193
    %v209 = vadd.f32 %v208, %v194
    %v210 = vadd.f32 %v209, %v195
    %v211 = vadd.f32 %v210, %v196
    %v212 = vadd.f32 %v211, %v197
    %v213 = vadd.f32 %v212, %v198
    %v214 = vrot.slane %v213, 4
    %v215 = vadd.f32 %v213, %v214
    %v216 = vrot.slane %v215, 2
    %v217 = vadd.f32 %v215, %v216
    %v218 = vrot.slane %v217, 1
    %v219 = vadd.f32 %v217, %v218
    %v220 = vld [vmem:[#allocation2] sm:$0x1]
    %v221 = vmul.f32 %v134, %v219
    %v222 = vadd.f32 %v220, %v221
    %223 = vst [vmem:[#allocation2] sm:$0x1] %v222
    %v224 = vld [vmem:[#allocation3] sm:$0x1]
    %v225 = vadd.f32 %v224, %v134
    %226 = vst [vmem:[#allocation3] sm:$0x1] %v225
    // Predicated region
    $region38: #{tpu_custom_call.1} parent=1 // pred_check
      %p227 = pneg %p73
    $region39: #{tpu_custom_call.1} parent=1 // pred_check_branch
      %229 = sbr.rel (%p227) target = $region41
    $region40: #{tpu_custom_call.1} parent=1 // pred_region
      %v230 = vld [vmem:[#allocation2] sm:$0x1]
      %vm231 = vcmask 1040384
      %v232 = vsel %vm231, %v230, 0.0
      %233 = vadd.xlane.f32.xlu0 %v232
      %v234 = vpop.xlane.xlu0 %233
      %v235 = vrot.slane %v234, 4
      %v236 = vadd.f32 %v234, %v235
      %v237 = vrot.slane %v236, 2
      %v238 = vadd.f32 %v236, %v237
      %v239 = vrot.slane %v238, 1
      %v240 = vadd.f32 %v238, %v239
      %s241 = vtos %v240
      %v242 = vld [vmem:[#allocation3] sm:$0x1]
      %v243 = vsel %vm231, %v242, 0.0
      %244 = vadd.xlane.f32.xlu0 %v243
      %v245 = vpop.xlane.xlu0 %244
      %v246 = vrot.slane %v245, 4
      %v247 = vadd.f32 %v245, %v246
      %v248 = vrot.slane %v247, 2
      %v249 = vadd.f32 %v247, %v248
      %v250 = vrot.slane %v249, 1
      %v251 = vadd.f32 %v249, %v250
      %s252 = vtos %v251
      %s253 = smul.f32 %s241, 0.0078125
      %v254 = vstv %s252
      %v255 = vrcp.pop %v254
      %s256 = vtos %v255
      %s257 = smul.f32 %s253, %s256
      %s258 = smul.f32 %s257, 5.0
      %s259 = scalar_lea.smem [#allocation12], 0
      %260 = sst [smem:[%s259]] %s258
    $region41: #{tpu_custom_call.1} parent=1 // pred_fallthru
      _
    // Predicated region
    $region42: #{tpu_custom_call.1} parent=1 // pred_check
      _
    $region43: #{tpu_custom_call.1} parent=1 // pred_check_branch
      %262 = sbr.rel (0) target = $region45
    $region44: #{tpu_custom_call.1} parent=1 // pred_region
      %s264 = ssub.s32 16, 16
      %265 = vsyncadd [#allocation6], %s264
      %268 = dma.smem_to_hbm [#allocation12], 16, %s4, [#allocation6]
    $region45: #{tpu_custom_call.1} parent=1 // pred_fallthru
      _
    // Predicated region
    $region46: #{tpu_custom_call.1} parent=1 // pred_check
      _
    $region47: #{tpu_custom_call.1} parent=1 // pred_check_branch
      %270 = sbr.rel (0) target = $region49
    $region48: #{tpu_custom_call.1} parent=1 // pred_region
      %271 = dma.done [#allocation6], 16
    $region49: #{tpu_custom_call.1} parent=1 // pred_fallthru
      _
    %272 = sfence
    %273 = vsyncpa [#allocation5], 1
    %274 = vsyncpa [#allocation8], 1
    %275 = vsyncpa [#allocation11], 1
    %276 = vsyncpa [#allocation6], 1

</llo_original>
